<compile_context>
chip_gen: v7x
topology: tpu7x:2x2x1
jax: 0.10.0
libtpu: 0.0.40
codegen_flags: <defaults>
</compile_context>

<pallas_src>
import functools
import math

import jax
import jax.numpy as jnp
from jax.experimental import pallas as pl
from jax.experimental.pallas import tpu as pltpu


def _memory_kernel(mi_ref, qi_ref, mo_ref, p_ref, mem_ref, *, inv_sqrt_de):
    # mi_ref : (THW, D_e)      memory keys, pre-transposed (lane-dense D_e)
    # qi_ref : (D_e, tile_hw)  query keys (lane-dense HW tile)
    # mo_ref : (D_o, THW)      memory values
    # p_ref  : (THW, tile_hw)  attention weights output (f32)
    # mem_ref: (D_o, tile_hw)  read-out memory output

    # Fold the 1/sqrt(D_e) scale into the small (D_e, tile_hw) operand instead
    # of the large (THW, tile_hw) score matrix.  Weakly-typed python scalar
    # keeps the query dtype (no accidental f32 promotion for bf16 inputs).
    qi = qi_ref[...] * inv_sqrt_de

    # (THW, D_e) @ (D_e, tile_hw) -> (THW, tile_hw); f32 accumulation on MXU.
    scores = jnp.dot(
        mi_ref[...], qi.astype(mi_ref.dtype),
        preferred_element_type=jnp.float32,
    )

    # Softmax over the memory axis (== torch softmax dim=1 of p).
    m = jnp.max(scores, axis=0, keepdims=True)
    e = jnp.exp(scores - m)
    denom = jnp.sum(e, axis=0, keepdims=True)
    p = e * pl.reciprocal(denom, approx=True)  # EUP vrcp, co-issues with VPU

    p_ref[...] = p.astype(p_ref.dtype)

    # (D_o, THW) @ (THW, tile_hw) -> (D_o, tile_hw); cast p to the value dtype
    # so bf16 values run the MXU at full rate (no-op for f32 inputs).
    mem = jnp.dot(
        mo_ref[...], p.astype(mo_ref.dtype),
        preferred_element_type=jnp.float32,
    )
    mem_ref[...] = mem.astype(mem_ref.dtype)


def _round_up(x, m):
    return ((x + m - 1) // m) * m


def _per_step_block_bytes(THW, D_e, D_o, tile_hw, in_itemsize, out_itemsize):
    mi = THW * D_e * in_itemsize
    qi = D_e * tile_hw * in_itemsize
    mo = D_o * THW * in_itemsize
    p = THW * tile_hw * 4  # p is emitted as f32
    mem = D_o * tile_hw * out_itemsize
    return mi + qi + mo + p + mem


def memory_forward(m_in, m_out, q_in, q_out, *, tile_hw=None):
    """Pallas implementation of Memory.forward.

    Returns (mem_out, p) with the exact PyTorch shapes:
      mem_out: (B, D_o + D_q, H, W)
      p      : (B, T*H*W, H*W)
    """
    B, D_e, T, H, W = m_in.shape
    _, D_o, _, _, _ = m_out.shape
    THW = T * H * W
    HW = H * W

    in_itemsize = jnp.dtype(m_in.dtype).itemsize
    out_itemsize = jnp.dtype(m_out.dtype).itemsize

    # Keys pre-transposed to (B, THW, D_e): a pure-layout transpose done once
    # by XLA so the kernel's first matmul needs no in-kernel transpose.
    mi_flat = jnp.transpose(m_in.reshape(B, D_e, THW), (0, 2, 1))  # (B, THW, D_e)
    qi_flat = q_in.reshape(B, D_e, HW)                             # (B, D_e, HW)
    mo_flat = m_out.reshape(B, D_o, THW)                           # (B, D_o, THW)

    # Lane-dense HW: pad to a multiple of 128 so p/mem stores are unmasked and
    # the MXU N dimension is full.  Padded query columns are zero; softmax is
    # over THW so they are independent and simply sliced off afterwards.
    HW_pad = _round_up(HW, 128)
    if HW_pad != HW:
        qi_flat = jnp.pad(qi_flat, ((0, 0), (0, 0), (0, HW_pad - HW)))

    # Pick the widest lane tile (multiple of 128) whose double-buffered VMEM
    # footprint stays within budget (v7x's 64 MiB VMEM included).
    if tile_hw is None:
        budget = 24 * 1024 * 1024
        tile_hw = 128
        for cand in (1024, 512, 256, 128):
            if cand <= HW_pad and HW_pad % cand == 0:
                if 2 * _per_step_block_bytes(
                        THW, D_e, D_o, cand, in_itemsize, out_itemsize) <= budget:
                    tile_hw = cand
                    break
    n_hw = HW_pad // tile_hw

    blk_bytes = _per_step_block_bytes(
        THW, D_e, D_o, tile_hw, in_itemsize, out_itemsize)
    vmem_limit = int(min(64 * 1024 * 1024, max(32 * 1024 * 1024, 4 * blk_bytes)))

    kernel = functools.partial(_memory_kernel, inv_sqrt_de=1.0 / math.sqrt(D_e))

    p_pad, mem_pad = pl.pallas_call(
        kernel,
        out_shape=(
            jax.ShapeDtypeStruct((B, THW, HW_pad), jnp.float32),
            jax.ShapeDtypeStruct((B, D_o, HW_pad), m_out.dtype),
        ),
        grid_spec=pltpu.PrefetchScalarGridSpec(
            num_scalar_prefetch=0,
            grid=(B, n_hw),
            in_specs=[
                # Keys / values stay resident across the HW axis (same block
                # index for every h -> no re-fetch between HW tiles).
                pl.BlockSpec((None, THW, D_e), lambda b, h: (b, 0, 0)),
                pl.BlockSpec((None, D_e, tile_hw), lambda b, h: (b, 0, h)),
                pl.BlockSpec((None, D_o, THW), lambda b, h: (b, 0, 0)),
            ],
            out_specs=[
                pl.BlockSpec((None, THW, tile_hw), lambda b, h: (b, 0, h)),
                pl.BlockSpec((None, D_o, tile_hw), lambda b, h: (b, 0, h)),
            ],
        ),
        compiler_params=pltpu.CompilerParams(
            dimension_semantics=("parallel", "parallel"),
            vmem_limit_bytes=vmem_limit,
        ),
    )(mi_flat, qi_flat, mo_flat)

    if HW_pad != HW:
        p = p_pad[:, :, :HW]
        mem = mem_pad[:, :, :HW]
    else:
        p, mem = p_pad, mem_pad

    mem = mem.reshape(B, D_o, H, W)
    mem_cat = jnp.concatenate([mem, q_out], axis=1)
    return mem_cat, p


def _reference_forward(m_in, m_out, q_in, q_out):
    """Pure-JAX reference mirroring the PyTorch forward."""
    B, D_e, T, H, W = m_in.shape
    _, D_o, _, _, _ = m_out.shape
    mi = jnp.transpose(m_in.reshape(B, D_e, T * H * W), (0, 2, 1))  # (B, THW, D_e)
    qi = q_in.reshape(B, D_e, H * W)
    p = jnp.einsum("bnd,bdh->bnh", mi, qi) / math.sqrt(D_e)
    p = jax.nn.softmax(p, axis=1)
    mo = m_out.reshape(B, D_o, T * H * W)
    mem = jnp.einsum("bdn,bnh->bdh", mo, p).reshape(B, D_o, H, W)
    return jnp.concatenate([mem, q_out], axis=1), p


if __name__ == "__main__":
    key = jax.random.PRNGKey(0)
    k1, k2, k3, k4 = jax.random.split(key, 4)

    B, D_e, D_o, T, H, W = 2, 32, 32, 2, 8, 8
    D_q = 32  # channels of q_out (concatenated with mem)

    m_in = jax.random.normal(k1, (B, D_e, T, H, W), dtype=jnp.float32)
    m_out = jax.random.normal(k2, (B, D_o, T, H, W), dtype=jnp.float32)
    q_in = jax.random.normal(k3, (B, D_e, H, W), dtype=jnp.float32)
    q_out = jax.random.normal(k4, (B, D_q, H, W), dtype=jnp.float32)

    mem_cat, p = jax.jit(memory_forward)(m_in, m_out, q_in, q_out)
    jax.block_until_ready((mem_cat, p))

    ref_mem, ref_p = _reference_forward(m_in, m_out, q_in, q_out)
    assert mem_cat.shape == (B, D_o + D_q, H, W)
    assert p.shape == (B, T * H * W, H * W)
    # approx=True softmax reciprocal slightly relaxes tolerances vs exact.
    assert jnp.allclose(p, ref_p, atol=2e-3, rtol=2e-3)
    assert jnp.allclose(mem_cat, ref_mem, atol=1e-2, rtol=1e-2)

    print("KERNEL_OK")
</pallas_src>

<mosaic_0001>
module attributes {stable_mosaic.version = 11 : i64} {
  func.func @_memory_kernel(%arg0: i32, %arg1: i32, %arg2: memref<1x128x32xf32, #tpu.memory_space<vmem>>, %arg3: memref<1x32x128xf32, #tpu.memory_space<vmem>>, %arg4: memref<1x32x128xf32, #tpu.memory_space<vmem>>, %arg5: memref<1x128x128xf32, #tpu.memory_space<vmem>>, %arg6: memref<1x32x128xf32, #tpu.memory_space<vmem>>) attributes {dimension_semantics = [#tpu.dimension_semantics<parallel>, #tpu.dimension_semantics<parallel>], iteration_bounds = array<i64: 2, 1>, scalar_prefetch = 0 : i64, scratch_operands = 0 : i64, tpu.core_type = #tpu.core_type<tc>, window_params = [{transform_indices = @transform_0, window_bounds = array<i64: 1, 128, 32>}, {transform_indices = @transform_1, window_bounds = array<i64: 1, 32, 128>}, {transform_indices = @transform_2, window_bounds = array<i64: 1, 32, 128>}, {transform_indices = @transform_3, window_bounds = array<i64: 1, 128, 128>}, {transform_indices = @transform_4, window_bounds = array<i64: 1, 32, 128>}]} {
    %c0 = arith.constant 0 : index
    %c0_0 = arith.constant 0 : index
    %c0_1 = arith.constant 0 : index
    %0 = vector.load %arg3[%c0, %c0_0, %c0_1] : memref<1x32x128xf32, #tpu.memory_space<vmem>>, vector<1x32x128xf32>
    %1 = vector.shape_cast %0 : vector<1x32x128xf32> to vector<32x128xf32>
    %cst = arith.constant 0.176776692 : f32
    %2 = vector.broadcast %cst : f32 to vector<32x128xf32>
    %3 = arith.mulf %1, %2 : vector<32x128xf32>
    %c0_2 = arith.constant 0 : index
    %c0_3 = arith.constant 0 : index
    %c0_4 = arith.constant 0 : index
    %4 = vector.load %arg2[%c0_2, %c0_3, %c0_4] : memref<1x128x32xf32, #tpu.memory_space<vmem>>, vector<1x128x32xf32>
    %5 = vector.shape_cast %4 : vector<1x128x32xf32> to vector<128x32xf32>
    %cst_5 = arith.constant dense<0.000000e+00> : vector<128x128xf32>
    %6 = tpu.matmul %5, %3, %cst_5 {dimension_numbers = #tpu.dot_dimension_numbers<[1], [0], [0], [1], [0, 0, 1, 1], [], []>} : vector<128x32xf32>, vector<32x128xf32>, vector<128x128xf32> -> vector<128x128xf32>
    %cst_6 = arith.constant dense<0xFF800000> : vector<128xf32>
    %7 = vector.multi_reduction <maximumf>, %6, %cst_6 [0] : vector<128x128xf32> to vector<128xf32>
    %8 = vector.shape_cast %7 : vector<128xf32> to vector<1x128xf32>
    %9 = vector.broadcast %8 : vector<1x128xf32> to vector<128x128xf32>
    %10 = arith.subf %6, %9 : vector<128x128xf32>
    %11 = math.exp %10 : vector<128x128xf32>
    %cst_7 = arith.constant dense<0.000000e+00> : vector<128xf32>
    %12 = vector.multi_reduction <add>, %11, %cst_7 [0] : vector<128x128xf32> to vector<128xf32>
    %13 = vector.shape_cast %12 : vector<128xf32> to vector<1x128xf32>
    %14 = tpu.reciprocal %13 {approx = true} : vector<1x128xf32> -> vector<1x128xf32>
    %15 = vector.broadcast %14 : vector<1x128xf32> to vector<128x128xf32>
    %16 = arith.mulf %11, %15 : vector<128x128xf32>
    %c0_8 = arith.constant 0 : index
    %c0_9 = arith.constant 0 : index
    %c0_10 = arith.constant 0 : index
    %17 = vector.load %arg5[%c0_8, %c0_9, %c0_10] : memref<1x128x128xf32, #tpu.memory_space<vmem>>, vector<1x128x128xf32>
    %18 = vector.shape_cast %17 : vector<1x128x128xf32> to vector<128x128xf32>
    %19 = vector.shape_cast %16 : vector<128x128xf32> to vector<1x128x128xf32>
    tpu.vector_store %arg5[%c0_8, %c0_9, %c0_10], %19 {strides = array<i32>} : memref<1x128x128xf32, #tpu.memory_space<vmem>>, vector<1x128x128xf32>,
    %c0_11 = arith.constant 0 : index
    %c0_12 = arith.constant 0 : index
    %c0_13 = arith.constant 0 : index
    %20 = vector.load %arg4[%c0_11, %c0_12, %c0_13] : memref<1x32x128xf32, #tpu.memory_space<vmem>>, vector<1x32x128xf32>
    %21 = vector.shape_cast %20 : vector<1x32x128xf32> to vector<32x128xf32>
    %cst_14 = arith.constant dense<0.000000e+00> : vector<32x128xf32>
    %22 = tpu.matmul %21, %16, %cst_14 {dimension_numbers = #tpu.dot_dimension_numbers<[1], [0], [0], [1], [0, 0, 1, 1], [], []>} : vector<32x128xf32>, vector<128x128xf32>, vector<32x128xf32> -> vector<32x128xf32>
    %c0_15 = arith.constant 0 : index
    %c0_16 = arith.constant 0 : index
    %c0_17 = arith.constant 0 : index
    %23 = vector.load %arg6[%c0_15, %c0_16, %c0_17] : memref<1x32x128xf32, #tpu.memory_space<vmem>>, vector<1x32x128xf32>
    %24 = vector.shape_cast %23 : vector<1x32x128xf32> to vector<32x128xf32>
    %25 = vector.shape_cast %22 : vector<32x128xf32> to vector<1x32x128xf32>
    tpu.vector_store %arg6[%c0_15, %c0_16, %c0_17], %25 {strides = array<i32>} : memref<1x32x128xf32, #tpu.memory_space<vmem>>, vector<1x32x128xf32>,
    return
  }
  func.func @transform_0(%arg0: i32, %arg1: i32) -> (i32, i32, i32) {
    %c0_i32 = arith.constant 0 : i32
    %c0_i32_0 = arith.constant 0 : i32
    %c0_i32_1 = arith.constant 0 : i32
    return %arg0, %c0_i32, %c0_i32_0 : i32, i32, i32
  }
  func.func @transform_1(%arg0: i32, %arg1: i32) -> (i32, i32, i32) {
    %c0_i32 = arith.constant 0 : i32
    %c0_i32_0 = arith.constant 0 : i32
    return %arg0, %c0_i32, %arg1 : i32, i32, i32
  }
  func.func @transform_2(%arg0: i32, %arg1: i32) -> (i32, i32, i32) {
    %c0_i32 = arith.constant 0 : i32
    %c0_i32_0 = arith.constant 0 : i32
    %c0_i32_1 = arith.constant 0 : i32
    return %arg0, %c0_i32, %c0_i32_0 : i32, i32, i32
  }
  func.func @transform_3(%arg0: i32, %arg1: i32) -> (i32, i32, i32) {
    %c0_i32 = arith.constant 0 : i32
    %c0_i32_0 = arith.constant 0 : i32
    return %arg0, %c0_i32, %arg1 : i32, i32, i32
  }
  func.func @transform_4(%arg0: i32, %arg1: i32) -> (i32, i32, i32) {
    %c0_i32 = arith.constant 0 : i32
    %c0_i32_0 = arith.constant 0 : i32
    return %arg0, %c0_i32, %arg1 : i32, i32, i32
  }
}

</mosaic_0001>

<llo_original>
// kernel: memory_forward.1
$region0: #{memory_forward.1}
  #allocation0 [shape = 'u32[]', space=smem, size = 0x4, offset = 0x4, fixed_abs, tag = 'smem constant byte address 0x4 - core index']
  #allocation1 [shape = 'u32[144,128]{1,0:T(1,128)}', space=vmem, size = 0x12000, scoped, tag = 'internal scratch']
  %s0 = inlined_call_operand.vmem [shape: f32[2,128,32], index: 0, kind: input, shape index: {}]
  %s1 = inlined_call_operand.vmem [shape: f32[2,32,128], index: 1, kind: input, shape index: {}]
  %s2 = inlined_call_operand.vmem [shape: f32[2,32,128], index: 2, kind: input, shape index: {}]
  %s3 = inlined_call_operand.vmem [shape: f32[2,128,128], index: 3, kind: output, shape index: {0}]
  %s4 = inlined_call_operand.vmem [shape: f32[2,32,128], index: 4, kind: output, shape index: {1}]
  %5 = xla_tuple %s3, %s4
  %s6 = sld [smem:[#allocation0]]
  $region53: #{memory_forward.1} parent=0
    _
  %s8 = ssub.s32 1, %s6
  %s9 = scalar_select 0, %s8, %s6
  loop: start=0, step=1, limit=4
  $region2: #{memory_forward.1} parent=0 // loop_pre_header
    _
  $region3: #{memory_forward.1} parent=0 // loop_header
    %s11 = sphi 0, %s15
    %p12 = scmp.ge.s32.totalorder %s11, 4
    %s18 = sphi 0, %s30
    %s19 = sphi 0, %s26
    %s20 = sphi 0, %s18
    %s21 = sphi 0, %s19
    %s22 = sphi 0, %s20
    %s23 = sphi 0, %s21
    %s33 = sphi 0, %s35
    %s36 = sphi 0, %s33
    %s37 = sphi 0, %s36
    %s53 = sphi 0, %s37
    %s61 = sphi 0, %s63
    %s64 = sphi 0, %s61
    %s65 = sphi 0, %s64
    %s81 = sphi 0, %s65
    %s87 = sphi 0, %s89
    %s90 = sphi 0, %s87
    %s91 = sphi 0, %s90
    %s107 = sphi 0, %s91
    %s115 = sphi 0, %s117
    %s118 = sphi 0, %s115
    %s119 = sphi 0, %s118
    %s135 = sphi 0, %s119
    %s143 = sphi 0, %s145
    %s146 = sphi 0, %s143
    %s147 = sphi 0, %s146
    %s163 = sphi 0, %s147
  $region4: #{memory_forward.1} parent=0 // loop_header_branch
    %14 = sbr.rel (%p12) target = $region8
  $region5: #{memory_forward.1} parent=0 // loop_body
    %s16 = ssub.s32 %s11, 1
    %s17 = ssub.s32 %s11, 2
    %s24 = sadd.s32 1, %s19
    %p25 = scmp.ge.s32.totalorder %s24, 1
    %s26 = scalar_select %p25, 0, %s24
    %s27 = sadd.s32 1, %s18
    %s28 = scalar_select %p25, %s27, %s18
    %p29 = scmp.ge.s32.totalorder %s28, 2
    %s30 = scalar_select %p29, 0, %s28
    %s31 = ssub.s32 %s18, %s30
    %p32 = scmp.eq.s32.totalorder %s31, 0
    %s34 = sadd.s32 %s33, 1
    %s35 = scalar_select %p32, %s33, %s34
    %p38 = pneg %p32
    %p39 = scmp.eq.s32.totalorder %s11, 1
    %p40 = por %p38, %p39
    %p41 = scmp.ne.s32.totalorder %s33, %s36
    %p42 = scmp.eq.s32.totalorder %s11, 0
    %p43 = por %p41, %p42
    %p44 = scmp.ne.s32.totalorder %s33, %s36
    %p45 = scmp.eq.s32.totalorder %s16, 1
    %p46 = por %p44, %p45
    %p47 = scmp.ne.s32.totalorder %s36, %s37
    %p48 = scmp.eq.s32.totalorder %s16, 0
    %p49 = por %p47, %p48
    %p50 = scmp.ne.s32.totalorder %s36, %s37
    %p51 = scmp.eq.s32.totalorder %s17, 1
    %p52 = por %p50, %p51
    %p54 = scmp.ne.s32.totalorder %s37, %s53
    %p55 = scmp.eq.s32.totalorder %s17, 0
    %p56 = por %p54, %p55
    %s57 = ssub.s32 %s18, %s30
    %s58 = ssub.s32 %s19, %s26
    %s59 = sor.u32 %s57, %s58
    %p60 = scmp.eq.s32.totalorder %s59, 0
    %s62 = sadd.s32 %s61, 1
    %s63 = scalar_select %p60, %s61, %s62
    %p66 = pneg %p60
    %p67 = scmp.eq.s32.totalorder %s11, 1
    %p68 = por %p66, %p67
    %p69 = scmp.ne.s32.totalorder %s61, %s64
    %p70 = scmp.eq.s32.totalorder %s11, 0
    %p71 = por %p69, %p70
    %p72 = scmp.ne.s32.totalorder %s61, %s64
    %p73 = scmp.eq.s32.totalorder %s16, 1
    %p74 = por %p72, %p73
    %p75 = scmp.ne.s32.totalorder %s64, %s65
    %p76 = scmp.eq.s32.totalorder %s16, 0
    %p77 = por %p75, %p76
    %p78 = scmp.ne.s32.totalorder %s64, %s65
    %p79 = scmp.eq.s32.totalorder %s17, 1
    %p80 = por %p78, %p79
    %p82 = scmp.ne.s32.totalorder %s65, %s81
    %p83 = scmp.eq.s32.totalorder %s17, 0
    %p84 = por %p82, %p83
    %s85 = ssub.s32 %s18, %s30
    %p86 = scmp.eq.s32.totalorder %s85, 0
    %s88 = sadd.s32 %s87, 1
    %s89 = scalar_select %p86, %s87, %s88
    %p92 = pneg %p86
    %p93 = scmp.eq.s32.totalorder %s11, 1
    %p94 = por %p92, %p93
    %p95 = scmp.ne.s32.totalorder %s87, %s90
    %p96 = scmp.eq.s32.totalorder %s11, 0
    %p97 = por %p95, %p96
    %p98 = scmp.ne.s32.totalorder %s87, %s90
    %p99 = scmp.eq.s32.totalorder %s16, 1
    %p100 = por %p98, %p99
    %p101 = scmp.ne.s32.totalorder %s90, %s91
    %p102 = scmp.eq.s32.totalorder %s16, 0
    %p103 = por %p101, %p102
    %p104 = scmp.ne.s32.totalorder %s90, %s91
    %p105 = scmp.eq.s32.totalorder %s17, 1
    %p106 = por %p104, %p105
    %p108 = scmp.ne.s32.totalorder %s91, %s107
    %p109 = scmp.eq.s32.totalorder %s17, 0
    %p110 = por %p108, %p109
    %s111 = ssub.s32 %s18, %s30
    %s112 = ssub.s32 %s19, %s26
    %s113 = sor.u32 %s111, %s112
    %p114 = scmp.eq.s32.totalorder %s113, 0
    %s116 = sadd.s32 %s115, 1
    %s117 = scalar_select %p114, %s115, %s116
    %p120 = pneg %p114
    %p121 = scmp.eq.s32.totalorder %s11, 1
    %p122 = por %p120, %p121
    %p123 = scmp.ne.s32.totalorder %s115, %s118
    %p124 = scmp.eq.s32.totalorder %s11, 0
    %p125 = por %p123, %p124
    %p126 = scmp.ne.s32.totalorder %s115, %s118
    %p127 = scmp.eq.s32.totalorder %s16, 1
    %p128 = por %p126, %p127
    %p129 = scmp.ne.s32.totalorder %s118, %s119
    %p130 = scmp.eq.s32.totalorder %s16, 0
    %p131 = por %p129, %p130
    %p132 = scmp.ne.s32.totalorder %s118, %s119
    %p133 = scmp.eq.s32.totalorder %s17, 1
    %p134 = por %p132, %p133
    %p136 = scmp.ne.s32.totalorder %s119, %s135
    %p137 = scmp.eq.s32.totalorder %s17, 0
    %p138 = por %p136, %p137
    %s139 = ssub.s32 %s18, %s30
    %s140 = ssub.s32 %s19, %s26
    %s141 = sor.u32 %s139, %s140
    %p142 = scmp.eq.s32.totalorder %s141, 0
    %s144 = sadd.s32 %s143, 1
    %s145 = scalar_select %p142, %s143, %s144
    %p148 = pneg %p142
    %p149 = scmp.eq.s32.totalorder %s11, 1
    %p150 = por %p148, %p149
    %p151 = scmp.ne.s32.totalorder %s143, %s146
    %p152 = scmp.eq.s32.totalorder %s11, 0
    %p153 = por %p151, %p152
    %p154 = scmp.ne.s32.totalorder %s143, %s146
    %p155 = scmp.eq.s32.totalorder %s16, 1
    %p156 = por %p154, %p155
    %p157 = scmp.ne.s32.totalorder %s146, %s147
    %p158 = scmp.eq.s32.totalorder %s16, 0
    %p159 = por %p157, %p158
    %p160 = scmp.ne.s32.totalorder %s146, %s147
    %p161 = scmp.eq.s32.totalorder %s17, 1
    %p162 = por %p160, %p161
    %p164 = scmp.ne.s32.totalorder %s147, %s163
    %p165 = scmp.eq.s32.totalorder %s17, 0
    %p166 = por %p164, %p165
    %p167 = scmp.le.s32.totalorder 1, %s11
    %p168 = scmp.lt.s32.totalorder %s11, 3
    %p169 = pnand %p167, %p168
    %p170 = pneg %p169
    // Predicated region
    $region9: #{memory_forward.1} parent=5 // pred_check
      _
    $region10: #{memory_forward.1} parent=5 // pred_check_branch
      %172 = sbr.rel (%p169) target = $region12
    $region11: #{memory_forward.1} parent=5 // pred_region
      %s173 = ssub.s32 %s11, 1
    $region12: #{memory_forward.1} parent=5 // pred_fallthru
      _
    %p174 = scmp.lt.s32.totalorder %s11, 2
    // Predicated region
    $region13: #{memory_forward.1} parent=5 // pred_check
      %p175 = pneg %p174
    $region14: #{memory_forward.1} parent=5 // pred_check_branch
      %177 = sbr.rel (%p175) target = $region16
    $region15: #{memory_forward.1} parent=5 // pred_region
      // Predicated region
      $region17: #{memory_forward.1} parent=15 // pred_check
        %p178 = pneg %p43
      $region18: #{memory_forward.1} parent=15 // pred_check_branch
        %180 = sbr.rel (%p178) target = $region20
      $region19: #{memory_forward.1} parent=15 // pred_region
        %p181 = scmp.lt.s32.totalorder %s18, 1
        %s182 = scalar_select %p181, %s18, 1
        %s183 = smul.addr %s182, 16
        %s184 = smul.addr %s183, 8
        %s185 = scalar_lea.vmem %s0, %s184
      $region20: #{memory_forward.1} parent=15 // pred_fallthru
        _
      // Predicated region
      $region21: #{memory_forward.1} parent=15 // pred_check
        %p186 = pneg %p71
      $region22: #{memory_forward.1} parent=15 // pred_check_branch
        %188 = sbr.rel (%p186) target = $region24
      $region23: #{memory_forward.1} parent=15 // pred_region
        %p189 = scmp.lt.s32.totalorder %s18, 1
        %s190 = scalar_select %p189, %s18, 1
        %p191 = scmp.lt.s32.totalorder %s19, 0
        %s192 = scalar_select %p191, %s19, 0
        %s193 = smul.addr %s190, 4
        %s194 = sadd.s32 %s192, %s193
        %s195 = smul.addr %s194, 8
        %s196 = scalar_lea.vmem %s1, %s195
      $region24: #{memory_forward.1} parent=15 // pred_fallthru
        _
      // Predicated region
      $region25: #{memory_forward.1} parent=15 // pred_check
        %p197 = pneg %p97
      $region26: #{memory_forward.1} parent=15 // pred_check_branch
        %199 = sbr.rel (%p197) target = $region28
      $region27: #{memory_forward.1} parent=15 // pred_region
        %p200 = scmp.lt.s32.totalorder %s18, 1
        %s201 = scalar_select %p200, %s18, 1
        %s202 = smul.addr %s201, 4
        %s203 = smul.addr %s202, 8
        %s204 = scalar_lea.vmem %s2, %s203
      $region28: #{memory_forward.1} parent=15 // pred_fallthru
        _
    $region16: #{memory_forward.1} parent=5 // pred_fallthru
      _
    %p205 = scmp.le.s32.totalorder 1, %s11
    %p206 = scmp.lt.s32.totalorder %s11, 3
    %p207 = pnand %p205, %p206
    %p208 = pneg %p207
    // Predicated region
    $region29: #{memory_forward.1} parent=5 // pred_check
      _
    $region30: #{memory_forward.1} parent=5 // pred_check_branch
      %210 = sbr.rel (%p207) target = $region32
    $region31: #{memory_forward.1} parent=5 // pred_region
      %s211 = ssub.s32 %s11, 1
      %p212 = scmp.lt.s32.totalorder %s20, 1
      %s213 = scalar_select %p212, %s20, 1
      %s214 = smul.addr %s213, 16
      %s215 = smul.addr %s214, 8
      %s216 = scalar_lea.vmem %s0, %s215
      %p217 = pneg %p49
      %p218 = pneg %p46
      %p219 = scmp.lt.s32.totalorder %s20, 1
      %s220 = scalar_select %p219, %s20, 1
      %p221 = scmp.lt.s32.totalorder %s21, 0
      %s222 = scalar_select %p221, %s21, 0
      %s223 = smul.addr %s220, 4
      %s224 = sadd.s32 %s222, %s223
      %s225 = smul.addr %s224, 8
      %s226 = scalar_lea.vmem %s1, %s225
      %p227 = pneg %p77
      %p228 = pneg %p74
      %p229 = scmp.lt.s32.totalorder %s20, 1
      %s230 = scalar_select %p229, %s20, 1
      %s231 = smul.addr %s230, 4
      %s232 = smul.addr %s231, 8
      %s233 = scalar_lea.vmem %s2, %s232
      %p234 = pneg %p103
      %p235 = pneg %p100
      %p236 = pneg %p131
      %p237 = pneg %p128
      %p238 = scmp.lt.s32.totalorder %s20, 1
      %s239 = scalar_select %p238, %s20, 1
      %p240 = scmp.lt.s32.totalorder %s21, 0
      %s241 = scalar_select %p240, %s21, 0
      %s242 = smul.addr %s239, 16
      %s243 = sadd.s32 %s241, %s242
      %s244 = smul.addr %s243, 8
      %s245 = scalar_lea.vmem %s3, %s244
      %p246 = pneg %p159
      %p247 = pneg %p156
      %p248 = scmp.lt.s32.totalorder %s20, 1
      %s249 = scalar_select %p248, %s20, 1
      %p250 = scmp.lt.s32.totalorder %s21, 0
      %s251 = scalar_select %p250, %s21, 0
      %s252 = smul.addr %s249, 4
      %s253 = sadd.s32 %s251, %s252
      %s254 = smul.addr %s253, 8
      %s255 = scalar_lea.vmem %s4, %s254
      %p256 = scmp.lt.s32.totalorder %s20, 1
      %s257 = scalar_select %p256, %s20, 1
      %s258 = smul.addr %s257, 16
      %s259 = smul.addr %s258, 8
      %s260 = scalar_lea.vmem %s0, %s259
      %p261 = scmp.lt.s32.totalorder %s20, 1
      %s262 = scalar_select %p261, %s20, 1
      %p263 = scmp.lt.s32.totalorder %s21, 0
      %s264 = scalar_select %p263, %s21, 0
      %s265 = smul.addr %s262, 4
      %s266 = sadd.s32 %s264, %s265
      %s267 = smul.addr %s266, 8
      %s268 = scalar_lea.vmem %s1, %s267
      %p269 = scmp.lt.s32.totalorder %s20, 1
      %s270 = scalar_select %p269, %s20, 1
      %s271 = smul.addr %s270, 4
      %s272 = smul.addr %s271, 8
      %s273 = scalar_lea.vmem %s2, %s272
      %p274 = scmp.lt.s32.totalorder %s20, 1
      %s275 = scalar_select %p274, %s20, 1
      %p276 = scmp.lt.s32.totalorder %s21, 0
      %s277 = scalar_select %p276, %s21, 0
      %s278 = smul.addr %s275, 16
      %s279 = sadd.s32 %s277, %s278
      %s280 = smul.addr %s279, 8
      %s281 = scalar_lea.vmem %s3, %s280
      %p282 = scmp.lt.s32.totalorder %s20, 1
      %s283 = scalar_select %p282, %s20, 1
      %p284 = scmp.lt.s32.totalorder %s21, 0
      %s285 = scalar_select %p284, %s21, 0
      %s286 = smul.addr %s283, 4
      %s287 = sadd.s32 %s285, %s286
      %s288 = smul.addr %s287, 8
      %s289 = scalar_lea.vmem %s4, %s288
      %v290 = vld [vmem:[%s268] sm:$0xff]
      %v291 = vld [vmem:[%s268 + $0x8] sm:$0xff]
      %v292 = vld [vmem:[%s268 + $0x10] sm:$0xff]
      %v293 = vld [vmem:[%s268 + $0x18] sm:$0xff]
      %v294 = vmul.f32 %v290, 0.17677669
      %v295 = vmul.f32 %v291, 0.17677669
      %v296 = vmul.f32 %v292, 0.17677669
      %v297 = vmul.f32 %v293, 0.17677669
      %v298 = vld [vmem:[%s260] sm:$0xff]
      %v299 = vld [vmem:[%s260 + $0x8] sm:$0xff]
      %v300 = vld [vmem:[%s260 + $0x10] sm:$0xff]
      %v301 = vld [vmem:[%s260 + $0x18] sm:$0xff]
      %v302 = vld [vmem:[%s260 + $0x20] sm:$0xff]
      %v303 = vld [vmem:[%s260 + $0x28] sm:$0xff]
      %v304 = vld [vmem:[%s260 + $0x30] sm:$0xff]
      %v305 = vld [vmem:[%s260 + $0x38] sm:$0xff]
      %v306 = vld [vmem:[%s260 + $0x40] sm:$0xff]
      %v307 = vld [vmem:[%s260 + $0x48] sm:$0xff]
      %v308 = vld [vmem:[%s260 + $0x50] sm:$0xff]
      %v309 = vld [vmem:[%s260 + $0x58] sm:$0xff]
      %v310 = vld [vmem:[%s260 + $0x60] sm:$0xff]
      %v311 = vld [vmem:[%s260 + $0x68] sm:$0xff]
      %v312 = vld [vmem:[%s260 + $0x70] sm:$0xff]
      %v313 = vld [vmem:[%s260 + $0x78] sm:$0xff]
      %vm314 = vcmask 261120
      %v316 = vsel %vm314, %v298, 0
      %v319 = vsel %vm314, %v299, 0
      %v322 = vsel %vm314, %v300, 0
      %v325 = vsel %vm314, %v301, 0
      %v328 = vsel %vm314, %v302, 0
      %v331 = vsel %vm314, %v303, 0
      %v334 = vsel %vm314, %v304, 0
      %v337 = vsel %vm314, %v305, 0
      %v340 = vsel %vm314, %v306, 0
      %v343 = vsel %vm314, %v307, 0
      %v346 = vsel %vm314, %v308, 0
      %v349 = vsel %vm314, %v309, 0
      %v352 = vsel %vm314, %v310, 0
      %v355 = vsel %vm314, %v311, 0
      %v358 = vsel %vm314, %v312, 0
      %v361 = vsel %vm314, %v313, 0
      %363 = vmatprep.subr.mxu0 0.0
      %364 = vmatpush1.msra.mxu0 %v294
      %365 = vmatprep.subr.mxu0 0.0
      %366 = vmatpush1.msra.mxu0 %v295
      %367 = vmatprep.subr.mxu0 0.0
      %368 = vmatpush1.msra.mxu0 %v296
      %369 = vmatprep.subr.mxu0 0.0
      %370 = vmatpush1.msra.mxu0 %v297
      %371 = vmatprep.subr.mxu0 0.0
      %372 = vmatpush1.msra.mxu0 0.0
      %373 = vmatprep.subr.mxu0 0.0
      %374 = vmatpush1.msra.mxu0 0.0
      %375 = vmatprep.subr.mxu0 0.0
      %376 = vmatpush1.msra.mxu0 0.0
      %377 = vmatprep.subr.mxu0 0.0
      %378 = vmatpush1.msra.mxu0 0.0
      %379 = vmatprep.subr.mxu0 0.0
      %380 = vmatpush1.msra.mxu0 0.0
      %381 = vmatprep.subr.mxu0 0.0
      %382 = vmatpush1.msra.mxu0 0.0
      %383 = vmatprep.subr.mxu0 0.0
      %384 = vmatpush1.msra.mxu0 0.0
      %385 = vmatprep.subr.mxu0 0.0
      %386 = vmatpush1.msra.mxu0 0.0
      %387 = vmatprep.subr.mxu0 0.0
      %388 = vmatpush1.msra.mxu0 0.0
      %389 = vmatprep.subr.mxu0 0.0
      %390 = vmatpush1.msra.mxu0 0.0
      %391 = vmatprep.subr.mxu0 0.0
      %392 = vmatpush1.msra.mxu0 0.0
      %393 = vmatprep.subr.mxu0 0.0
      %394 = vmatpush1.msra.mxu0 0.0
      %395 = vmatprep.subr.mxu0 0.0
      %396 = vmatpush1.msra.mxu0 0.0
      %397 = vmatprep.subr.mxu0 0.0
      %398 = vmatpush1.msra.mxu0 0.0
      %399 = vmatprep.subr.mxu0 0.0
      %400 = vmatpush1.msra.mxu0 0.0
      %401 = vmatprep.subr.mxu0 0.0
      %402 = vmatpush1.msra.mxu0 0.0
      %403 = vmatprep.subr.mxu0 0.0
      %404 = vmatpush1.msra.mxu0 0.0
      %405 = vmatprep.subr.mxu0 0.0
      %406 = vmatpush1.msra.mxu0 0.0
      %407 = vmatprep.subr.mxu0 0.0
      %408 = vmatpush1.msra.mxu0 0.0
      %409 = vmatprep.subr.mxu0 0.0
      %410 = vmatpush1.msra.mxu0 0.0
      %411 = vmatprep.subr.mxu0 0.0
      %412 = vmatpush1.msra.mxu0 0.0
      %413 = vmatprep.subr.mxu0 0.0
      %414 = vmatpush1.msra.mxu0 0.0
      %415 = vmatprep.subr.mxu0 0.0
      %416 = vmatpush1.msra.mxu0 0.0
      %417 = vmatprep.subr.mxu0 0.0
      %418 = vmatpush1.msra.mxu0 0.0
      %419 = vmatprep.subr.mxu0 0.0
      %420 = vmatpush1.msra.mxu0 0.0
      %421 = vmatprep.subr.mxu0 0.0
      %422 = vmatpush1.msra.mxu0 0.0
      %423 = vmatprep.subr.mxu0 0.0
      %424 = vmatpush1.msra.mxu0 0.0
      %425 = vmatprep.subr.mxu0 0.0
      %426 = vmatpush1.msra.mxu0 0.0
      %427 = vmatprep.mubr.f32.mxu0 0.0
      %428 = vmatmul.mubr.f32.gmra.mrb[0].mxu0 %v316
      %v429 = vpop.f32.mrb[0].mxu0
      %v430 = vadd.f32 0.0, %v429
      %v431 = vpop.f32.mrb[0].mxu0
      %432 = vmatprep.mubr.f32.mxu0 0.0
      %433 = vmatmul.mubr.f32.gmra.mrb[0].mxu0 %v319
      %v434 = vpop.f32.mrb[0].mxu0
      %v435 = vadd.f32 0.0, %v434
      %v436 = vpop.f32.mrb[0].mxu0
      %437 = vmatprep.mubr.f32.mxu0 0.0
      %438 = vmatmul.mubr.f32.gmra.mrb[0].mxu0 %v322
      %v439 = vpop.f32.mrb[0].mxu0
      %v440 = vadd.f32 0.0, %v439
      %v441 = vpop.f32.mrb[0].mxu0
      %442 = vmatprep.mubr.f32.mxu0 0.0
      %443 = vmatmul.mubr.f32.gmra.mrb[0].mxu0 %v325
      %v444 = vpop.f32.mrb[0].mxu0
      %v445 = vadd.f32 0.0, %v444
      %v446 = vpop.f32.mrb[0].mxu0
      %447 = vmatprep.mubr.f32.mxu0 0.0
      %448 = vmatmul.mubr.f32.gmra.mrb[0].mxu0 %v328
      %v449 = vpop.f32.mrb[0].mxu0
      %v450 = vadd.f32 0.0, %v449
      %v451 = vpop.f32.mrb[0].mxu0
      %452 = vmatprep.mubr.f32.mxu0 0.0
      %453 = vmatmul.mubr.f32.gmra.mrb[0].mxu0 %v331
      %v454 = vpop.f32.mrb[0].mxu0
      %v455 = vadd.f32 0.0, %v454
      %v456 = vpop.f32.mrb[0].mxu0
      %457 = vmatprep.mubr.f32.mxu0 0.0
      %458 = vmatmul.mubr.f32.gmra.mrb[0].mxu0 %v334
      %v459 = vpop.f32.mrb[0].mxu0
      %v460 = vadd.f32 0.0, %v459
      %v461 = vpop.f32.mrb[0].mxu0
      %462 = vmatprep.mubr.f32.mxu0 0.0
      %463 = vmatmul.mubr.f32.gmra.mrb[0].mxu0 %v337
      %v464 = vpop.f32.mrb[0].mxu0
      %v465 = vadd.f32 0.0, %v464
      %v466 = vpop.f32.mrb[0].mxu0
      %467 = vmatprep.mubr.f32.mxu0 0.0
      %468 = vmatmul.mubr.f32.gmra.mrb[0].mxu0 %v340
      %v469 = vpop.f32.mrb[0].mxu0
      %v470 = vadd.f32 0.0, %v469
      %v471 = vpop.f32.mrb[0].mxu0
      %472 = vmatprep.mubr.f32.mxu0 0.0
      %473 = vmatmul.mubr.f32.gmra.mrb[0].mxu0 %v343
      %v474 = vpop.f32.mrb[0].mxu0
      %v475 = vadd.f32 0.0, %v474
      %v476 = vpop.f32.mrb[0].mxu0
      %477 = vmatprep.mubr.f32.mxu0 0.0
      %478 = vmatmul.mubr.f32.gmra.mrb[0].mxu0 %v346
      %v479 = vpop.f32.mrb[0].mxu0
      %v480 = vadd.f32 0.0, %v479
      %v481 = vpop.f32.mrb[0].mxu0
      %482 = vmatprep.mubr.f32.mxu0 0.0
      %483 = vmatmul.mubr.f32.gmra.mrb[0].mxu0 %v349
      %v484 = vpop.f32.mrb[0].mxu0
      %v485 = vadd.f32 0.0, %v484
      %v486 = vpop.f32.mrb[0].mxu0
      %487 = vmatprep.mubr.f32.mxu0 0.0
      %488 = vmatmul.mubr.f32.gmra.mrb[0].mxu0 %v352
      %v489 = vpop.f32.mrb[0].mxu0
      %v490 = vadd.f32 0.0, %v489
      %v491 = vpop.f32.mrb[0].mxu0
      %492 = vmatprep.mubr.f32.mxu0 0.0
      %493 = vmatmul.mubr.f32.gmra.mrb[0].mxu0 %v355
      %v494 = vpop.f32.mrb[0].mxu0
      %v495 = vadd.f32 0.0, %v494
      %v496 = vpop.f32.mrb[0].mxu0
      %497 = vmatprep.mubr.f32.mxu0 0.0
      %498 = vmatmul.mubr.f32.gmra.mrb[0].mxu0 %v358
      %v499 = vpop.f32.mrb[0].mxu0
      %v500 = vadd.f32 0.0, %v499
      %v501 = vpop.f32.mrb[0].mxu0
      %502 = vmatprep.mubr.f32.mxu0 0.0
      %503 = vmatmul.mubr.f32.gmra.mrb[0].mxu0 %v361
      %v504 = vpop.f32.mrb[0].mxu0
      %v505 = vadd.f32 0.0, %v504
      %v506 = vpop.f32.mrb[0].mxu0
      %507 = vdwg.mxu0
      %v508 = vmax.f32 %v430, %v450
      %v509 = vmax.f32 %v435, %v455
      %v510 = vmax.f32 %v440, %v460
      %v511 = vmax.f32 %v445, %v465
      %v512 = vmax.f32 %v508, %v470
      %v513 = vmax.f32 %v509, %v475
      %v514 = vmax.f32 %v510, %v480
      %v515 = vmax.f32 %v511, %v485
      %v516 = vmax.f32 %v512, %v490
      %v517 = vmax.f32 %v513, %v495
      %v518 = vmax.f32 %v514, %v500
      %v519 = vmax.f32 %v515, %v505
      %v520 = vmax.f32 %v516, %v517
      %v521 = vmax.f32 %v518, %v519
      %v522 = vmax.f32 %v520, %v521
      %v523 = vrot.slane %v522, 4
      %v524 = vmax.f32 %v522, %v523
      %v525 = vrot.slane %v524, 2
      %v526 = vmax.f32 %v524, %v525
      %v527 = vrot.slane %v526, 1
      %v528 = vmax.f32 %v526, %v527
      %v529 = vsub.f32 %v430, %v528
      %v530 = vsub.f32 %v435, %v528
      %v531 = vsub.f32 %v440, %v528
      %v532 = vsub.f32 %v445, %v528
      %v533 = vsub.f32 %v450, %v528
      %v534 = vsub.f32 %v455, %v528
      %v535 = vsub.f32 %v460, %v528
      %v536 = vsub.f32 %v465, %v528
      %v537 = vsub.f32 %v470, %v528
      %v538 = vsub.f32 %v475, %v528
      %v539 = vsub.f32 %v480, %v528
      %v540 = vsub.f32 %v485, %v528
      %v541 = vsub.f32 %v490, %v528
      %v542 = vsub.f32 %v495, %v528
      %v543 = vsub.f32 %v500, %v528
      %v544 = vsub.f32 %v505, %v528
      %v545 = vmul.f32 %v529, 1.442695
      %v546 = vpow.pop %v545
      %v547 = vmul.f32 %v530, 1.442695
      %v548 = vpow.pop %v547
      %v549 = vmul.f32 %v531, 1.442695
      %v550 = vpow.pop %v549
      %v551 = vmul.f32 %v532, 1.442695
      %v552 = vpow.pop %v551
      %v553 = vmul.f32 %v533, 1.442695
      %v554 = vpow.pop %v553
      %v555 = vmul.f32 %v534, 1.442695
      %v556 = vpow.pop %v555
      %v557 = vmul.f32 %v535, 1.442695
      %v558 = vpow.pop %v557
      %v559 = vmul.f32 %v536, 1.442695
      %v560 = vpow.pop %v559
      %v561 = vmul.f32 %v537, 1.442695
      %v562 = vpow.pop %v561
      %v563 = vmul.f32 %v538, 1.442695
      %v564 = vpow.pop %v563
      %v565 = vmul.f32 %v539, 1.442695
      %v566 = vpow.pop %v565
      %v567 = vmul.f32 %v540, 1.442695
      %v568 = vpow.pop %v567
      %v569 = vmul.f32 %v541, 1.442695
      %v570 = vpow.pop %v569
      %v571 = vmul.f32 %v542, 1.442695
      %v572 = vpow.pop %v571
      %v573 = vmul.f32 %v543, 1.442695
      %v574 = vpow.pop %v573
      %v575 = vmul.f32 %v544, 1.442695
      %v576 = vpow.pop %v575
      %v577 = vadd.f32 %v546, %v548
      %v578 = vadd.f32 %v577, %v550
      %v579 = vadd.f32 %v578, %v552
      %v580 = vadd.f32 %v579, %v554
      %v581 = vadd.f32 %v580, %v556
      %v582 = vadd.f32 %v581, %v558
      %v583 = vadd.f32 %v582, %v560
      %v584 = vadd.f32 %v583, %v562
      %v585 = vadd.f32 %v584, %v564
      %v586 = vadd.f32 %v585, %v566
      %v587 = vadd.f32 %v586, %v568
      %v588 = vadd.f32 %v587, %v570
      %v589 = vadd.f32 %v588, %v572
      %v590 = vadd.f32 %v589, %v574
      %v591 = vadd.f32 %v590, %v576
      %v592 = vrot.slane %v591, 4
      %v593 = vadd.f32 %v591, %v592
      %v594 = vrot.slane %v593, 2
      %v595 = vadd.f32 %v593, %v594
      %v596 = vrot.slane %v595, 1
      %v597 = vadd.f32 %v595, %v596
      %v598 = vrcp.pop %v597
      %v599 = vmul.f32 %v546, %v598
      %v600 = vmul.f32 %v548, %v598
      %v601 = vmul.f32 %v550, %v598
      %v602 = vmul.f32 %v552, %v598
      %v603 = vmul.f32 %v554, %v598
      %v604 = vmul.f32 %v556, %v598
      %v605 = vmul.f32 %v558, %v598
      %v606 = vmul.f32 %v560, %v598
      %v607 = vmul.f32 %v562, %v598
      %v608 = vmul.f32 %v564, %v598
      %v609 = vmul.f32 %v566, %v598
      %v610 = vmul.f32 %v568, %v598
      %v611 = vmul.f32 %v570, %v598
      %v612 = vmul.f32 %v572, %v598
      %v613 = vmul.f32 %v574, %v598
      %v614 = vmul.f32 %v576, %v598
      %615 = vst [vmem:[%s281] sm:$0xff] %v599
      %616 = vst [vmem:[%s281 + $0x8] sm:$0xff] %v600
      %617 = vst [vmem:[%s281 + $0x10] sm:$0xff] %v601
      %618 = vst [vmem:[%s281 + $0x18] sm:$0xff] %v602
      %619 = vst [vmem:[%s281 + $0x20] sm:$0xff] %v603
      %620 = vst [vmem:[%s281 + $0x28] sm:$0xff] %v604
      %621 = vst [vmem:[%s281 + $0x30] sm:$0xff] %v605
      %622 = vst [vmem:[%s281 + $0x38] sm:$0xff] %v606
      %623 = vst [vmem:[%s281 + $0x40] sm:$0xff] %v607
      %624 = vst [vmem:[%s281 + $0x48] sm:$0xff] %v608
      %625 = vst [vmem:[%s281 + $0x50] sm:$0xff] %v609
      %626 = vst [vmem:[%s281 + $0x58] sm:$0xff] %v610
      %627 = vst [vmem:[%s281 + $0x60] sm:$0xff] %v611
      %628 = vst [vmem:[%s281 + $0x68] sm:$0xff] %v612
      %629 = vst [vmem:[%s281 + $0x70] sm:$0xff] %v613
      %630 = vst [vmem:[%s281 + $0x78] sm:$0xff] %v614
      %v631 = vld [vmem:[%s273] sm:$0xff]
      %v632 = vld [vmem:[%s273 + $0x8] sm:$0xff]
      %v633 = vld [vmem:[%s273 + $0x10] sm:$0xff]
      %v634 = vld [vmem:[%s273 + $0x18] sm:$0xff]
      %635 = vmatprep.subr.mxu0 0.0
      %636 = vmatpush1.msra.mxu0 %v599
      %637 = vmatprep.subr.mxu0 0.0
      %638 = vmatpush1.msra.mxu0 %v600
      %639 = vmatprep.subr.mxu0 0.0
      %640 = vmatpush1.msra.mxu0 %v601
      %641 = vmatprep.subr.mxu0 0.0
      %642 = vmatpush1.msra.mxu0 %v602
      %643 = vmatprep.subr.mxu0 0.0
      %644 = vmatpush1.msra.mxu0 %v603
      %645 = vmatprep.subr.mxu0 0.0
      %646 = vmatpush1.msra.mxu0 %v604
      %647 = vmatprep.subr.mxu0 0.0
      %648 = vmatpush1.msra.mxu0 %v605
      %649 = vmatprep.subr.mxu0 0.0
      %650 = vmatpush1.msra.mxu0 %v606
      %651 = vmatprep.subr.mxu0 0.0
      %652 = vmatpush1.msra.mxu0 %v607
      %653 = vmatprep.subr.mxu0 0.0
      %654 = vmatpush1.msra.mxu0 %v608
      %655 = vmatprep.subr.mxu0 0.0
      %656 = vmatpush1.msra.mxu0 %v609
      %657 = vmatprep.subr.mxu0 0.0
      %658 = vmatpush1.msra.mxu0 %v610
      %659 = vmatprep.subr.mxu0 0.0
      %660 = vmatpush1.msra.mxu0 %v611
      %661 = vmatprep.subr.mxu0 0.0
      %662 = vmatpush1.msra.mxu0 %v612
      %663 = vmatprep.subr.mxu0 0.0
      %664 = vmatpush1.msra.mxu0 %v613
      %665 = vmatprep.subr.mxu0 0.0
      %666 = vmatpush1.msra.mxu0 %v614
      %667 = vmatprep.subr.mxu0 0.0
      %668 = vmatpush1.msra.mxu0 0.0
      %669 = vmatprep.subr.mxu0 0.0
      %670 = vmatpush1.msra.mxu0 0.0
      %671 = vmatprep.subr.mxu0 0.0
      %672 = vmatpush1.msra.mxu0 0.0
      %673 = vmatprep.subr.mxu0 0.0
      %674 = vmatpush1.msra.mxu0 0.0
      %675 = vmatprep.subr.mxu0 0.0
      %676 = vmatpush1.msra.mxu0 0.0
      %677 = vmatprep.subr.mxu0 0.0
      %678 = vmatpush1.msra.mxu0 0.0
      %679 = vmatprep.subr.mxu0 0.0
      %680 = vmatpush1.msra.mxu0 0.0
      %681 = vmatprep.subr.mxu0 0.0
      %682 = vmatpush1.msra.mxu0 0.0
      %683 = vmatprep.subr.mxu0 0.0
      %684 = vmatpush1.msra.mxu0 0.0
      %685 = vmatprep.subr.mxu0 0.0
      %686 = vmatpush1.msra.mxu0 0.0
      %687 = vmatprep.subr.mxu0 0.0
      %688 = vmatpush1.msra.mxu0 0.0
      %689 = vmatprep.subr.mxu0 0.0
      %690 = vmatpush1.msra.mxu0 0.0
      %691 = vmatprep.subr.mxu0 0.0
      %692 = vmatpush1.msra.mxu0 0.0
      %693 = vmatprep.subr.mxu0 0.0
      %694 = vmatpush1.msra.mxu0 0.0
      %695 = vmatprep.subr.mxu0 0.0
      %696 = vmatpush1.msra.mxu0 0.0
      %697 = vmatprep.subr.mxu0 0.0
      %698 = vmatpush1.msra.mxu0 0.0
      %699 = vmatprep.mubr.f32.mxu0 0.0
      %700 = vmatmul.mubr.f32.gmra.mrb[0].mxu0 %v631
      %v701 = vpop.f32.mrb[0].mxu0
      %v702 = vadd.f32 0.0, %v701
      %v703 = vpop.f32.mrb[0].mxu0
      %704 = vmatprep.mubr.f32.mxu0 0.0
      %705 = vmatmul.mubr.f32.gmra.mrb[0].mxu0 %v632
      %v706 = vpop.f32.mrb[0].mxu0
      %v707 = vadd.f32 0.0, %v706
      %v708 = vpop.f32.mrb[0].mxu0
      %709 = vmatprep.mubr.f32.mxu0 0.0
      %710 = vmatmul.mubr.f32.gmra.mrb[0].mxu0 %v633
      %v711 = vpop.f32.mrb[0].mxu0
      %v712 = vadd.f32 0.0, %v711
      %v713 = vpop.f32.mrb[0].mxu0
      %714 = vmatprep.mubr.f32.mxu0 0.0
      %715 = vmatmul.mubr.f32.gmra.mrb[0].mxu0 %v634
      %v716 = vpop.f32.mrb[0].mxu0
      %v717 = vadd.f32 0.0, %v716
      %v718 = vpop.f32.mrb[0].mxu0
      %719 = vdwg.mxu0
      %720 = vst [vmem:[%s289] sm:$0xff] %v702
      %721 = vst [vmem:[%s289 + $0x8] sm:$0xff] %v707
      %722 = vst [vmem:[%s289 + $0x10] sm:$0xff] %v712
      %723 = vst [vmem:[%s289 + $0x18] sm:$0xff] %v717
      %p724 = scmp.lt.s32.totalorder %s20, 1
      %s725 = scalar_select %p724, %s20, 1
      %p726 = scmp.lt.s32.totalorder %s21, 0
      %s727 = scalar_select %p726, %s21, 0
      %s728 = smul.addr %s725, 16
      %s729 = sadd.s32 %s727, %s728
      %s730 = smul.addr %s729, 8
      %s731 = scalar_lea.vmem %s3, %s730
      %p732 = scmp.lt.s32.totalorder %s20, 1
      %s733 = scalar_select %p732, %s20, 1
      %p734 = scmp.lt.s32.totalorder %s21, 0
      %s735 = scalar_select %p734, %s21, 0
      %s736 = smul.addr %s733, 4
      %s737 = sadd.s32 %s735, %s736
      %s738 = smul.addr %s737, 8
      %s739 = scalar_lea.vmem %s4, %s738
      // Predicated region
      $region33: #{memory_forward.1} parent=31 // pred_check
        %p740 = pneg %p128
      $region34: #{memory_forward.1} parent=31 // pred_check_branch
        %742 = sbr.rel (%p740) target = $region36
      $region35: #{memory_forward.1} parent=31 // pred_region
        _
      $region36: #{memory_forward.1} parent=31 // pred_fallthru
        _
      // Predicated region
      $region37: #{memory_forward.1} parent=31 // pred_check
        %p743 = pneg %p156
      $region38: #{memory_forward.1} parent=31 // pred_check_branch
        %745 = sbr.rel (%p743) target = $region40
      $region39: #{memory_forward.1} parent=31 // pred_region
        _
      $region40: #{memory_forward.1} parent=31 // pred_fallthru
        _
    $region32: #{memory_forward.1} parent=5 // pred_fallthru
      _
    %p746 = scmp.le.s32.totalorder 2, %s11
    // Predicated region
    $region41: #{memory_forward.1} parent=5 // pred_check
      %p747 = pneg %p746
    $region42: #{memory_forward.1} parent=5 // pred_check_branch
      %749 = sbr.rel (%p747) target = $region44
    $region43: #{memory_forward.1} parent=5 // pred_region
      %s750 = ssub.s32 %s11, 2
      // Predicated region
      $region45: #{memory_forward.1} parent=43 // pred_check
        %p751 = pneg %p134
      $region46: #{memory_forward.1} parent=43 // pred_check_branch
        %753 = sbr.rel (%p751) target = $region48
      $region47: #{memory_forward.1} parent=43 // pred_region
        %p754 = scmp.lt.s32.totalorder %s22, 1
        %s755 = scalar_select %p754, %s22, 1
        %p756 = scmp.lt.s32.totalorder %s23, 0
        %s757 = scalar_select %p756, %s23, 0
        %s758 = smul.addr %s755, 16
        %s759 = sadd.s32 %s757, %s758
        %s760 = smul.addr %s759, 8
        %s761 = scalar_lea.vmem %s3, %s760
      $region48: #{memory_forward.1} parent=43 // pred_fallthru
        _
      // Predicated region
      $region49: #{memory_forward.1} parent=43 // pred_check
        %p762 = pneg %p162
      $region50: #{memory_forward.1} parent=43 // pred_check_branch
        %764 = sbr.rel (%p762) target = $region52
      $region51: #{memory_forward.1} parent=43 // pred_region
        %p765 = scmp.lt.s32.totalorder %s22, 1
        %s766 = scalar_select %p765, %s22, 1
        %p767 = scmp.lt.s32.totalorder %s23, 0
        %s768 = scalar_select %p767, %s23, 0
        %s769 = smul.addr %s766, 4
        %s770 = sadd.s32 %s768, %s769
        %s771 = smul.addr %s770, 8
        %s772 = scalar_lea.vmem %s4, %s771
      $region52: #{memory_forward.1} parent=43 // pred_fallthru
        _
    $region44: #{memory_forward.1} parent=5 // pred_fallthru
      _
  $region6: #{memory_forward.1} parent=0 // loop_footer
    %s15 = sadd.s32 1, %s11
  $region7: #{memory_forward.1} parent=0 // loop_footer_branch
    %10 = sbr.rel target = $region3
  $region8: #{memory_forward.1} parent=0 // loop_exit
    _

</llo_original>
